<compile_context>
chip_gen: v7x
topology: tpu7x:2x2x1
jax: 0.10.0
libtpu: 0.0.40
codegen_flags: <defaults>
</compile_context>

<pallas_src>
import jax
import jax.numpy as jnp
from jax import lax
from jax.experimental import pallas as pl
from jax.experimental.pallas import tpu as pltpu


def _self_output_kernel(x_ref, w_ref, o_ref):
    # x_ref: (TM, K) f32 (cast to bf16 in-kernel), w_ref: (TN_or_N, K) bf16,
    # o_ref: (TM, TN_or_N) out dtype.
    # Contract on the last axes (einsum 'mk,nk->mn'); MXU handles the
    # transposed contraction natively — no weight transpose materialized.
    x = x_ref[...].astype(jnp.bfloat16)
    o_ref[...] = lax.dot_general(
        x,
        w_ref[...],
        dimension_numbers=(((1,), (1,)), ((), ())),
        preferred_element_type=jnp.float32,
    ).astype(o_ref.dtype)


def _round_up(x, m):
    return ((x + m - 1) // m) * m


def _vmem_capacity_bytes():
    # Generation-aware VMEM capacity; conservative fallback (v7x = 64 MiB/TC).
    try:
        info = pltpu.get_tpu_info()
        cap = int(getattr(info, "vmem_capacity_bytes"))
        if cap > 0:
            return cap
    except Exception:
        pass
    return 64 * 1024 * 1024


def reformer_self_output(hidden_states, weight, *, tile_m=512, tile_n=256):
    """hidden_states: [B, S, all_head_size] ; weight: [hidden_size, all_head_size]
    Returns [B, S, hidden_size]. Dropout is a no-op (inference mode)."""
    B, S, K = hidden_states.shape
    N, Kw = weight.shape
    assert K == Kw, "weight in_features must match all_head_size"
    M = B * S
    out_dtype = hidden_states.dtype
    x_bytes = jnp.dtype(hidden_states.dtype).itemsize
    out_bytes = jnp.dtype(out_dtype).itemsize

    # Activations stay in their original dtype (no wrapper-side cast / extra
    # HBM pass); the weight cast is one-time / constant under jit.
    x2d = hidden_states.reshape(M, K)
    w_bf16 = weight.astype(jnp.bfloat16)  # [N, K] — no transpose materialized

    vmem_cap = _vmem_capacity_bytes()
    budget = int(0.70 * vmem_cap)

    # --------- path 1: whole weight resident in VMEM, 1-D grid over M ----------
    def resident_need(tm):
        # double-buffered x tile + out tile; assume 2x for the weight block too
        return 2 * N * K * 2 + 2 * tm * K * x_bytes + 2 * tm * N * out_bytes

    tm = max(16, min(tile_m, _round_up(M, 16)))  # multiple of 16, vreg-dense
    while resident_need(tm) > budget and tm > 64:
        tm = max(64, tm // 2)
    use_resident = resident_need(tm) <= budget

    if use_resident:
        grid = (pl.cdiv(M, tm),)
        in_specs = [
            pl.BlockSpec((tm, K), lambda i: (i, 0)),   # activations (f32)
            pl.BlockSpec((N, K), lambda i: (0, 0)),    # full weight, resident
        ]
        out_specs = pl.BlockSpec((tm, N), lambda i: (i, 0))
        dim_sem = ("parallel",)                         # v7x: split M across TCs
        need = resident_need(tm)
        bytes_accessed = M * K * x_bytes + N * K * 2 + M * N * out_bytes
    else:
        # --------- path 2 (fallback, huge N*K): 2-D tiled grid ----------
        tn = min(tile_n, _round_up(N, 128))            # lane-dense output tiles
        tm2 = max(16, min(tile_m, _round_up(M, 16)))

        def tiled_need(tm_, tn_):
            return (2 * tm_ * K * x_bytes
                    + 2 * tn_ * K * 2
                    + 2 * tm_ * tn_ * out_bytes)

        while tiled_need(tm2, tn) > budget and (tm2 > 64 or tn > 128):
            if tm2 >= tn and tm2 > 64:
                tm2 = max(64, tm2 // 2)
            elif tn > 128:
                tn = max(128, tn // 2)
            else:
                break

        # n-tiles outer, m-tiles inner -> weight block constant over inner loop.
        grid = (pl.cdiv(N, tn), pl.cdiv(M, tm2))
        in_specs = [
            pl.BlockSpec((tm2, K), lambda j, i: (i, 0)),
            pl.BlockSpec((tn, K), lambda j, i: (j, 0)),
        ]
        out_specs = pl.BlockSpec((tm2, tn), lambda j, i: (i, j))
        dim_sem = ("parallel", "parallel")
        need = tiled_need(tm2, tn)
        bytes_accessed = (pl.cdiv(N, tn) * M * K * x_bytes
                          + N * K * 2 + M * N * out_bytes)

    vmem_limit = int(min(max(need + (8 << 20), 32 << 20), int(0.9 * vmem_cap)))
    vmem_limit = max(vmem_limit, need)

    cost = pl.CostEstimate(
        flops=2 * M * N * K,
        transcendentals=0,
        bytes_accessed=int(bytes_accessed),
    )

    out2d = pl.pallas_call(
        _self_output_kernel,
        out_shape=jax.ShapeDtypeStruct((M, N), out_dtype),
        grid_spec=pltpu.PrefetchScalarGridSpec(
            num_scalar_prefetch=0,
            grid=grid,
            in_specs=in_specs,
            out_specs=out_specs,
        ),
        compiler_params=pltpu.CompilerParams(
            dimension_semantics=dim_sem,
            vmem_limit_bytes=vmem_limit,
        ),
        cost_estimate=cost,
    )(x2d, w_bf16)

    # TODO(synk): dropout(p=0.05) is identity at inference; training-mode
    # dropout (pltpu.prng_seed / prng_random_bits masking) is not implemented.
    return out2d.reshape(B, S, N)


if __name__ == "__main__":
    # Small config: num_attention_heads=2, attention_head_size=64 -> all_head_size=128
    # hidden_size=128, batch=2, seq=8.
    num_attention_heads = 2
    attention_head_size = 64
    all_head_size = num_attention_heads * attention_head_size  # 128
    hidden_size = 128
    batch, seq = 2, 8

    key = jax.random.PRNGKey(0)
    k_x, k_w = jax.random.split(key)

    hidden_states = jax.random.normal(
        k_x, (batch, seq, all_head_size), dtype=jnp.float32
    )
    # nn.Linear default init: U(-1/sqrt(in_features), 1/sqrt(in_features))
    bound = 1.0 / (all_head_size ** 0.5)
    weight = jax.random.uniform(
        k_w, (hidden_size, all_head_size), dtype=jnp.float32,
        minval=-bound, maxval=bound,
    )

    out = reformer_self_output(hidden_states, weight)
    out = jax.block_until_ready(out)
    assert out.shape == (batch, seq, hidden_size)

    # Reference with the same bf16 operand cast + f32 accumulation (MXU path).
    x_ref = hidden_states.astype(jnp.bfloat16).astype(jnp.float32)
    w_ref = weight.astype(jnp.bfloat16).astype(jnp.float32)
    ref = jnp.einsum("bsk,nk->bsn", x_ref, w_ref)
    assert jnp.allclose(out, ref, atol=1e-3, rtol=1e-3)

    # Sanity-check against the full-f32 reference with bf16-level slack.
    ref_f32 = jnp.einsum("bsk,nk->bsn", hidden_states, weight)
    assert jnp.allclose(out, ref_f32, atol=3e-2, rtol=3e-2)

    print("KERNEL_OK")
</pallas_src>

<mosaic_0001>
module attributes {stable_mosaic.version = 11 : i64} {
  func.func @_self_output_kernel(%arg0: i32, %arg1: memref<16x128xf32, #tpu.memory_space<vmem>>, %arg2: memref<128x128xbf16, #tpu.memory_space<vmem>>, %arg3: memref<16x128xf32, #tpu.memory_space<vmem>>) attributes {dimension_semantics = [#tpu.dimension_semantics<parallel>], iteration_bounds = array<i64: 1>, scalar_prefetch = 0 : i64, scratch_operands = 0 : i64, tpu.core_type = #tpu.core_type<tc>, window_params = [{transform_indices = @transform_0, window_bounds = array<i64: 16, 128>}, {pipeline_mode = #tpu.pipeline_mode<synchronous>, transform_indices = @transform_1, window_bounds = array<i64: 128, 128>}, {transform_indices = @transform_2, window_bounds = array<i64: 16, 128>}]} {
    %c0 = arith.constant 0 : index
    %c0_0 = arith.constant 0 : index
    %0 = vector.load %arg1[%c0, %c0_0] : memref<16x128xf32, #tpu.memory_space<vmem>>, vector<16x128xf32>
    %1 = arith.truncf %0 : vector<16x128xf32> to vector<16x128xbf16>
    %c0_1 = arith.constant 0 : index
    %c0_2 = arith.constant 0 : index
    %2 = vector.load %arg2[%c0_1, %c0_2] : memref<128x128xbf16, #tpu.memory_space<vmem>>, vector<128x128xbf16>
    %cst = arith.constant dense<0.000000e+00> : vector<16x128xf32>
    %3 = tpu.matmul %1, %2, %cst {dimension_numbers = #tpu.dot_dimension_numbers<[1], [1], [0], [0], [0, 0, 1, 0], [], []>} : vector<16x128xbf16>, vector<128x128xbf16>, vector<16x128xf32> -> vector<16x128xf32>
    %c0_3 = arith.constant 0 : index
    %c0_4 = arith.constant 0 : index
    %4 = vector.load %arg3[%c0_3, %c0_4] : memref<16x128xf32, #tpu.memory_space<vmem>>, vector<16x128xf32>
    tpu.vector_store %arg3[%c0_3, %c0_4], %3 {strides = array<i32>} : memref<16x128xf32, #tpu.memory_space<vmem>>, vector<16x128xf32>,
    return
  }
  func.func @transform_0(%arg0: i32) -> (i32, i32) {
    %c0_i32 = arith.constant 0 : i32
    %c0_i32_0 = arith.constant 0 : i32
    return %arg0, %c0_i32 : i32, i32
  }
  func.func @transform_1(%arg0: i32) -> (i32, i32) {
    %c0_i32 = arith.constant 0 : i32
    %c0_i32_0 = arith.constant 0 : i32
    %c0_i32_1 = arith.constant 0 : i32
    return %c0_i32, %c0_i32_0 : i32, i32
  }
  func.func @transform_2(%arg0: i32) -> (i32, i32) {
    %c0_i32 = arith.constant 0 : i32
    %c0_i32_0 = arith.constant 0 : i32
    return %arg0, %c0_i32 : i32, i32
  }
}

</mosaic_0001>

<llo_original>
// kernel: tpu_custom_call.1
$region0: #{tpu_custom_call.1}
  #allocation0 [shape = 'u32[]', space=smem, size = 0x4, offset = 0x4, fixed_abs, tag = 'smem constant byte address 0x4 - core index']
  #allocation1 [shape = 'u32[144,128]{1,0:T(1,128)}', space=vmem, size = 0x12000, scoped, tag = 'internal scratch']
  %s0 = inlined_call_operand.hbm [shape: f32[16,128], index: 0, kind: input, shape index: {}]
  %s1 = inlined_call_operand.hbm [shape: bf16[128,128], index: 1, kind: input, shape index: {}]
  %s2 = inlined_call_operand.hbm [shape: f32[16,128], index: 2, kind: output, shape index: {}]
  %s3 = sld [smem:[#allocation0]]
  $region26: #{tpu_custom_call.1} parent=0
    _
  %s5 = ssub.s32 1, %s3
  %s6 = scalar_select 0, %s5, %s3
  $region1: #{tpu_custom_call.1} parent=0
    #allocation2 [shape = 'u8[8192]{0}', space=vmem, size = 0x2000, scoped, tag = 'input window, operand 0, single buffered']
    #allocation3 [shape = 's32[1]{0}', space=sflag, size = 0x4, scoped, tag = 'scoped memory for tpu_custom_call.1']
    #allocation4 [shape = 's32[1]{0}', space=sflag, size = 0x4, scoped, tag = 'scoped memory for tpu_custom_call.1']
    #allocation5 [shape = 'u8[32768]{0}', space=vmem, size = 0x8000, scoped, tag = 'input window, operand 1, single buffered']
    #allocation6 [shape = 's32[1]{0}', space=sflag, size = 0x4, scoped, tag = 'scoped memory for tpu_custom_call.1']
    #allocation7 [shape = 'u8[8192]{0}', space=vmem, size = 0x2000, scoped, tag = 'output window, operand 0, single buffered']
    %7 = vsyncpa [#allocation3], 0
    %8 = vsyncpa [#allocation6], 0
    %9 = vsyncpa [#allocation4], 0
    // Predicated region
    $region2: #{tpu_custom_call.1} parent=1 // pred_check
      _
    $region3: #{tpu_custom_call.1} parent=1 // pred_check_branch
      %11 = sbr.rel (0) target = $region5
    $region4: #{tpu_custom_call.1} parent=1 // pred_region
      %s13 = ssub.s32 256, 256
      %14 = vsyncadd [#allocation3], %s13
      %s15 = sshll.u32 [#allocation2], 4
      %s16 = int_to_ptr.vmem [resolvable:$true] %s15
      %21 = dma.hbm_to_vmem [thread:$0]  %s0, 256, %s16, [#allocation3], 128, 128, 8
    $region5: #{tpu_custom_call.1} parent=1 // pred_fallthru
      _
    // Predicated region
    $region6: #{tpu_custom_call.1} parent=1 // pred_check
      _
    $region7: #{tpu_custom_call.1} parent=1 // pred_check_branch
      %23 = sbr.rel (0) target = $region9
    $region8: #{tpu_custom_call.1} parent=1 // pred_region
      %s25 = ssub.s32 1024, 1024
      %26 = vsyncadd [#allocation6], %s25
      %s27 = sshll.u32 [#allocation5], 4
      %s28 = int_to_ptr.vmem [resolvable:$true] %s27
      %33 = dma.hbm_to_vmem [thread:$0]  %s1, 1024, %s28, [#allocation6], 64, 64, 4
    $region9: #{tpu_custom_call.1} parent=1 // pred_fallthru
      _
    // Predicated region
    $region10: #{tpu_custom_call.1} parent=1 // pred_check
      _
    $region11: #{tpu_custom_call.1} parent=1 // pred_check_branch
      %35 = sbr.rel (0) target = $region13
    $region12: #{tpu_custom_call.1} parent=1 // pred_region
      %36 = dma.done [#allocation3], 256
    $region13: #{tpu_custom_call.1} parent=1 // pred_fallthru
      _
    // Predicated region
    $region14: #{tpu_custom_call.1} parent=1 // pred_check
      _
    $region15: #{tpu_custom_call.1} parent=1 // pred_check_branch
      %38 = sbr.rel (0) target = $region17
    $region16: #{tpu_custom_call.1} parent=1 // pred_region
      %39 = dma.done [#allocation6], 1024
    $region17: #{tpu_custom_call.1} parent=1 // pred_fallthru
      _
    %v41 = vld [vmem:[#allocation2] sm:$0xff]
    %v42 = vld [vmem:[#allocation2 + $0x8] sm:$0xff]
    %v43 = vpack.c.bf16 %v42, %v41
    %v44 = vld [vmem:[#allocation5] sm:$0xf]
    %v45 = vld [vmem:[#allocation5 + $0x4] sm:$0xf]
    %v46 = vld [vmem:[#allocation5 + $0x8] sm:$0xf]
    %v47 = vld [vmem:[#allocation5 + $0xc] sm:$0xf]
    %v48 = vld [vmem:[#allocation5 + $0x10] sm:$0xf]
    %v49 = vld [vmem:[#allocation5 + $0x14] sm:$0xf]
    %v50 = vld [vmem:[#allocation5 + $0x18] sm:$0xf]
    %v51 = vld [vmem:[#allocation5 + $0x1c] sm:$0xf]
    %v52 = vld [vmem:[#allocation5 + $0x20] sm:$0xf]
    %v53 = vld [vmem:[#allocation5 + $0x24] sm:$0xf]
    %v54 = vld [vmem:[#allocation5 + $0x28] sm:$0xf]
    %v55 = vld [vmem:[#allocation5 + $0x2c] sm:$0xf]
    %v56 = vld [vmem:[#allocation5 + $0x30] sm:$0xf]
    %v57 = vld [vmem:[#allocation5 + $0x34] sm:$0xf]
    %v58 = vld [vmem:[#allocation5 + $0x38] sm:$0xf]
    %v59 = vld [vmem:[#allocation5 + $0x3c] sm:$0xf]
    %v76 = vunpack.c.l.b16 %v44
    %v77 = vunpack.c.l.b16 %v45
    %v78 = vunpack.c.l.b16 %v46
    %v79 = vunpack.c.l.b16 %v47
    %v80 = vunpack.c.l.b16 %v48
    %v81 = vunpack.c.l.b16 %v49
    %v82 = vunpack.c.l.b16 %v50
    %v83 = vunpack.c.l.b16 %v51
    %v84 = vunpack.c.l.b16 %v52
    %v85 = vunpack.c.l.b16 %v53
    %v86 = vunpack.c.l.b16 %v54
    %v87 = vunpack.c.l.b16 %v55
    %v88 = vunpack.c.l.b16 %v56
    %v89 = vunpack.c.l.b16 %v57
    %v90 = vunpack.c.l.b16 %v58
    %v91 = vunpack.c.l.b16 %v59
    %v92 = vpack.c.b16 %v77, %v76
    %v93 = vpack.c.b16 %v79, %v78
    %v94 = vpack.c.b16 %v81, %v80
    %v95 = vpack.c.b16 %v83, %v82
    %v96 = vpack.c.b16 %v85, %v84
    %v97 = vpack.c.b16 %v87, %v86
    %v98 = vpack.c.b16 %v89, %v88
    %v99 = vpack.c.b16 %v91, %v90
    %108 = vmatprep.subr.bf16.mxu0 0
    %109 = vmatpush1.bf16.xpose.msra.mxu0 %v92
    %110 = vmatprep.subr.bf16.mxu0 0
    %111 = vmatpush1.bf16.xpose.msra.mxu0 %v93
    %112 = vmatprep.subr.bf16.mxu0 0
    %113 = vmatpush1.bf16.xpose.msra.mxu0 %v94
    %114 = vmatprep.subr.bf16.mxu0 0
    %115 = vmatpush1.bf16.xpose.msra.mxu0 %v95
    %116 = vmatprep.subr.bf16.mxu0 0
    %117 = vmatpush1.bf16.xpose.msra.mxu0 %v96
    %118 = vmatprep.subr.bf16.mxu0 0
    %119 = vmatpush1.bf16.xpose.msra.mxu0 %v97
    %120 = vmatprep.subr.bf16.mxu0 0
    %121 = vmatpush1.bf16.xpose.msra.mxu0 %v98
    %122 = vmatprep.subr.bf16.mxu0 0
    %123 = vmatpush1.bf16.xpose.msra.mxu0 %v99
    %124 = vmatprep.subr.bf16.mxu0 0
    %125 = vmatpush1.bf16.xpose.msra.mxu0 0
    %126 = vmatprep.subr.bf16.mxu0 0
    %127 = vmatpush1.bf16.xpose.msra.mxu0 0
    %128 = vmatprep.subr.bf16.mxu0 0
    %129 = vmatpush1.bf16.xpose.msra.mxu0 0
    %130 = vmatprep.subr.bf16.mxu0 0
    %131 = vmatpush1.bf16.xpose.msra.mxu0 0
    %132 = vmatprep.subr.bf16.mxu0 0
    %133 = vmatpush1.bf16.xpose.msra.mxu0 0
    %134 = vmatprep.subr.bf16.mxu0 0
    %135 = vmatpush1.bf16.xpose.msra.mxu0 0
    %136 = vmatprep.subr.bf16.mxu0 0
    %137 = vmatpush1.bf16.xpose.msra.mxu0 0
    %138 = vmatprep.subr.bf16.mxu0 0
    %139 = vmatpush1.bf16.xpose.msra.mxu0 0
    %140 = vmatprep.mubr.bf16.mxu0 0
    %141 = vmatmul.mubr.bf16.gmra.mrb[0].mxu0 %v43
    %v142 = vpop.f32.mrb[0].mxu0
    %v143 = vadd.f32 0.0, %v142
    %v144 = vpop.f32.mrb[0].mxu0
    %v145 = vpop.f32.mrb[0].mxu0
    %v146 = vadd.f32 0.0, %v145
    %v147 = vpop.f32.mrb[0].mxu0
    %148 = vdwg.mxu0
    %149 = vst [vmem:[#allocation7] sm:$0xff] %v143
    %150 = vst [vmem:[#allocation7 + $0x8] sm:$0xff] %v146
    // Predicated region
    $region18: #{tpu_custom_call.1} parent=1 // pred_check
      _
    $region19: #{tpu_custom_call.1} parent=1 // pred_check_branch
      %152 = sbr.rel (0) target = $region21
    $region20: #{tpu_custom_call.1} parent=1 // pred_region
      %s154 = ssub.s32 256, 256
      %155 = vsyncadd [#allocation4], %s154
      %s156 = sshll.u32 [#allocation7], 4
      %s157 = int_to_ptr.vmem [resolvable:$true] %s156
      %162 = dma.vmem_to_hbm [thread:$0]  %s157, 256, %s2, [#allocation4], 128, 128, 8
    $region21: #{tpu_custom_call.1} parent=1 // pred_fallthru
      _
    // Predicated region
    $region22: #{tpu_custom_call.1} parent=1 // pred_check
      _
    $region23: #{tpu_custom_call.1} parent=1 // pred_check_branch
      %164 = sbr.rel (0) target = $region25
    $region24: #{tpu_custom_call.1} parent=1 // pred_region
      %165 = dma.done [#allocation4], 256
    $region25: #{tpu_custom_call.1} parent=1 // pred_fallthru
      _
    %166 = vsyncpa [#allocation3], 1
    %167 = vsyncpa [#allocation6], 1
    %168 = vsyncpa [#allocation4], 1

</llo_original>
